<compile_context>
chip_gen: v6e
topology: v6e:2x2x1
jax: 0.10.0
libtpu: 0.0.40
codegen_flags: <defaults>
</compile_context>

<pallas_src>
import functools

import jax
import jax.numpy as jnp
import numpy as np
from jax.experimental import pallas as pl
from jax.experimental.pallas import tpu as pltpu

NEG_SLOPE = 0.01
BN_EPS = 1e-5
LANES = 128


def _round_up(x, m):
    return (x + m - 1) // m * m


def conv_relu_stats_kernel(p_ref, w_ref, b_ref, y_ref, stats_ref, *, m_true, tm):
    """Pass 1: y = LeakyReLU(patches @ W + bias); per-tile sum / sum-of-squares for BN."""
    i = pl.program_id(0)
    # MXU: bf16 x bf16 -> f32 accumulate
    y = jnp.dot(p_ref[...], w_ref[...], preferred_element_type=jnp.float32)
    y = y + b_ref[...]                                  # conv bias (f32, broadcast over rows)
    y = jnp.where(y > 0, y, NEG_SLOPE * y)              # LeakyReLU(0.01), f32 on VPU
    # Mask rows past the true M so zero-padded rows never pollute the BN statistics.
    rows = jax.lax.broadcasted_iota(jnp.int32, (tm, 1), 0) + i * tm
    y = jnp.where(rows < m_true, y, 0.0)
    y_ref[...] = y
    s = jnp.sum(y, axis=0, keepdims=True)               # (1, C_pad)
    ss = jnp.sum(y * y, axis=0, keepdims=True)          # (1, C_pad)
    stats_ref[...] = jnp.concatenate([s, ss], axis=0)[None]   # (1, 2, C_pad)


def bn_apply_kernel(y_ref, ss_ref, o_ref):
    """Pass 2: fused BatchNorm affine out = y*scale + shift. Dropout(eval) = identity."""
    ss = ss_ref[...]
    o_ref[...] = y_ref[...] * ss[0:1, :] + ss[1:2, :]


def conv1d_block_forward(x, weight, bias, gamma, beta, stride, *, tm_max=512):
    """x: (N, C_in, L) f32; weight: (C_out, C_in, K); returns (N, C_out, L_out) f32."""
    N, C_in, L = x.shape
    C_out, _, K = weight.shape
    L_out = (L - K) // stride + 1
    M = N * L_out
    KC = C_in * K
    C_pad = _round_up(C_out, LANES)          # lane-dense output columns

    # --- glue (plain JAX): im2col unfold + parameter packing / padding ---
    idx = jnp.arange(L_out)[:, None] * stride + jnp.arange(K)[None, :]   # (L_out, K)
    patches = x[:, :, idx]                                # (N, C_in, L_out, K)
    patches = jnp.transpose(patches, (0, 2, 1, 3)).reshape(M, KC)

    tm = min(tm_max, _round_up(M, 8))
    M_pad = _round_up(M, tm)
    n_tiles = M_pad // tm

    patches = jnp.pad(patches, ((0, M_pad - M), (0, 0))).astype(jnp.bfloat16)
    w2 = jnp.pad(weight.reshape(C_out, KC).T,
                 ((0, 0), (0, C_pad - C_out))).astype(jnp.bfloat16)      # (KC, C_pad)
    b2 = jnp.pad(bias.reshape(1, C_out),
                 ((0, 0), (0, C_pad - C_out))).astype(jnp.float32)       # (1,  C_pad)

    cparams = pltpu.CompilerParams(
        dimension_semantics=("parallel",),           # M tiles independent -> both TCs on v7x
        vmem_limit_bytes=32 * 1024 * 1024)

    flops1 = 2 * M_pad * KC * C_pad + 8 * M_pad * C_pad
    bytes1 = (patches.size * 2 + w2.size * 2 + b2.size * 4
              + M_pad * C_pad * 4 + n_tiles * 2 * C_pad * 4)
    y, stats = pl.pallas_call(
        functools.partial(conv_relu_stats_kernel, m_true=M, tm=tm),
        out_shape=(jax.ShapeDtypeStruct((M_pad, C_pad), jnp.float32),
                   jax.ShapeDtypeStruct((n_tiles, 2, C_pad), jnp.float32)),
        grid=(n_tiles,),
        in_specs=[pl.BlockSpec((tm, KC), lambda i: (i, 0)),
                  pl.BlockSpec((KC, C_pad), lambda i: (0, 0)),
                  pl.BlockSpec((1, C_pad), lambda i: (0, 0))],
        out_specs=(pl.BlockSpec((tm, C_pad), lambda i: (i, 0)),
                   pl.BlockSpec((1, 2, C_pad), lambda i: (i, 0, 0))),
        compiler_params=cparams,
        cost_estimate=pl.CostEstimate(flops=flops1, transcendentals=0,
                                      bytes_accessed=bytes1),
    )(patches, w2, b2)

    # --- tiny O(C_out) per-channel reduction + fused BN scale/shift (plain JAX) ---
    sums = jnp.sum(stats[:, 0, :C_out], axis=0)
    sumsq = jnp.sum(stats[:, 1, :C_out], axis=0)
    mean = sums / M                                       # divide by the TRUE row count
    var = jnp.maximum(sumsq / M - mean * mean, 0.0)       # biased variance (PyTorch forward)
    scale = gamma * jax.lax.rsqrt(var + BN_EPS)
    shift = beta - mean * scale
    scale_shift = jnp.pad(jnp.stack([scale, shift], axis=0),
                          ((0, 0), (0, C_pad - C_out))).astype(jnp.float32)   # (2, C_pad)

    flops2 = 2 * M_pad * C_pad
    bytes2 = 2 * M_pad * C_pad * 4 + scale_shift.size * 4
    out_flat = pl.pallas_call(
        bn_apply_kernel,
        out_shape=jax.ShapeDtypeStruct((M_pad, C_pad), jnp.float32),
        grid=(n_tiles,),
        in_specs=[pl.BlockSpec((tm, C_pad), lambda i: (i, 0)),
                  pl.BlockSpec((2, C_pad), lambda i: (0, 0))],
        out_specs=pl.BlockSpec((tm, C_pad), lambda i: (i, 0)),
        compiler_params=cparams,
        cost_estimate=pl.CostEstimate(flops=flops2, transcendentals=0,
                                      bytes_accessed=bytes2),
    )(y, scale_shift)

    out = out_flat[:M, :C_out].reshape(N, L_out, C_out)
    # TODO(synk): keep NLC for the downstream consumer to avoid this HBM transpose.
    return jnp.transpose(out, (0, 2, 1))                  # NCW: (N, C_out, L_out)


def reference_forward(x, weight, bias, gamma, beta, stride):
    """Pure-JAX reference (same bf16-rounded matmul inputs, f32 math, eval-mode dropout)."""
    xb = x.astype(jnp.bfloat16).astype(jnp.float32)
    wb = weight.astype(jnp.bfloat16).astype(jnp.float32)
    y = jax.lax.conv_general_dilated(
        xb, wb, window_strides=(stride,), padding="VALID",
        dimension_numbers=("NCH", "OIH", "NCH"),
        precision=jax.lax.Precision.HIGHEST)
    y = y + bias[None, :, None]
    y = jnp.where(y > 0, y, NEG_SLOPE * y)
    mean = jnp.mean(y, axis=(0, 2), keepdims=True)
    var = jnp.mean((y - mean) ** 2, axis=(0, 2), keepdims=True)
    y = (y - mean) * jax.lax.rsqrt(var + BN_EPS)
    return y * gamma[None, :, None] + beta[None, :, None]


if __name__ == "__main__":
    # shapes consistent with conv1DBlock(in_channels=4, out_channels=8, kernel_size=5, stride=2)
    N, C_in, L = 2, 4, 64
    C_out, K, stride = 8, 5, 2

    key = jax.random.PRNGKey(0)
    kx, kw, kb = jax.random.split(key, 3)

    x = jax.random.normal(kx, (N, C_in, L), dtype=jnp.float32)

    # deterministic PyTorch-like init: uniform(-1/sqrt(fan_in), 1/sqrt(fan_in))
    fan_in = C_in * K
    bound = 1.0 / np.sqrt(fan_in)
    weight = jax.random.uniform(kw, (C_out, C_in, K), minval=-bound, maxval=bound,
                                dtype=jnp.float32)
    bias = jax.random.uniform(kb, (C_out,), minval=-bound, maxval=bound, dtype=jnp.float32)
    gamma = jnp.ones((C_out,), dtype=jnp.float32)   # BatchNorm1d weight init
    beta = jnp.zeros((C_out,), dtype=jnp.float32)   # BatchNorm1d bias init

    out = jax.block_until_ready(conv1d_block_forward(x, weight, bias, gamma, beta, stride))
    ref = jax.block_until_ready(reference_forward(x, weight, bias, gamma, beta, stride))

    L_out = (L - K) // stride + 1
    assert out.shape == (N, C_out, L_out), out.shape
    np.testing.assert_allclose(np.asarray(out), np.asarray(ref), rtol=5e-4, atol=5e-4)

    print("KERNEL_OK")
</pallas_src>

<mosaic_0001>
module attributes {stable_mosaic.version = 11 : i64} {
  func.func @conv_relu_stats_kernel(%arg0: i32, %arg1: memref<64x20xbf16, #tpu.memory_space<vmem>>, %arg2: memref<20x128xbf16, #tpu.memory_space<vmem>>, %arg3: memref<1x128xf32, #tpu.memory_space<vmem>>, %arg4: memref<64x128xf32, #tpu.memory_space<vmem>>, %arg5: memref<1x2x128xf32, #tpu.memory_space<vmem>>) attributes {dimension_semantics = [#tpu.dimension_semantics<parallel>], iteration_bounds = array<i64: 1>, scalar_prefetch = 0 : i64, scratch_operands = 0 : i64, tpu.core_type = #tpu.core_type<tc>, window_params = [{transform_indices = @transform_0, window_bounds = array<i64: 64, 20>}, {pipeline_mode = #tpu.pipeline_mode<synchronous>, transform_indices = @transform_1, window_bounds = array<i64: 20, 128>}, {pipeline_mode = #tpu.pipeline_mode<synchronous>, transform_indices = @transform_2, window_bounds = array<i64: 1, 128>}, {transform_indices = @transform_3, window_bounds = array<i64: 64, 128>}, {transform_indices = @transform_4, window_bounds = array<i64: 1, 2, 128>}]} {
    %c0 = arith.constant 0 : index
    %c0_0 = arith.constant 0 : index
    %0 = vector.load %arg1[%c0, %c0_0] : memref<64x20xbf16, #tpu.memory_space<vmem>>, vector<64x20xbf16>
    %c0_1 = arith.constant 0 : index
    %c0_2 = arith.constant 0 : index
    %1 = vector.load %arg2[%c0_1, %c0_2] : memref<20x128xbf16, #tpu.memory_space<vmem>>, vector<20x128xbf16>
    %cst = arith.constant dense<0.000000e+00> : vector<64x128xf32>
    %2 = tpu.matmul %0, %1, %cst {dimension_numbers = #tpu.dot_dimension_numbers<[1], [0], [0], [1], [0, 0, 1, 1], [], []>} : vector<64x20xbf16>, vector<20x128xbf16>, vector<64x128xf32> -> vector<64x128xf32>
    %c0_3 = arith.constant 0 : index
    %c0_4 = arith.constant 0 : index
    %3 = vector.load %arg3[%c0_3, %c0_4] : memref<1x128xf32, #tpu.memory_space<vmem>>, vector<1x128xf32>
    %4 = vector.broadcast %3 : vector<1x128xf32> to vector<64x128xf32>
    %5 = arith.addf %2, %4 : vector<64x128xf32>
    %cst_5 = arith.constant 0.000000e+00 : f32
    %6 = vector.broadcast %cst_5 : f32 to vector<64x128xf32>
    %7 = arith.cmpf ogt, %5, %6 : vector<64x128xf32>
    %cst_6 = arith.constant 0.00999999977 : f32
    %8 = vector.broadcast %cst_6 : f32 to vector<64x128xf32>
    %9 = arith.mulf %8, %5 : vector<64x128xf32>
    %10 = arith.select %7, %5, %9 : vector<64x128xi1>, vector<64x128xf32>
    %11 = tpu.iota {dimensions = array<i32: 0>} : vector<64x1xi32>
    %c64_i32 = arith.constant 64 : i32
    %12 = arith.muli %arg0, %c64_i32 : i32
    %13 = vector.broadcast %12 : i32 to vector<64x1xi32>
    %14 = arith.addi %11, %13 : vector<64x1xi32>
    %c60_i32 = arith.constant 60 : i32
    %15 = vector.broadcast %c60_i32 : i32 to vector<64x1xi32>
    %16 = arith.cmpi slt, %14, %15 : vector<64x1xi32>
    %cst_7 = arith.constant 0.000000e+00 : f32
    %17 = vector.shape_cast %16 : vector<64x1xi1> to vector<64x1xi1>
    %18 = vector.broadcast %17 : vector<64x1xi1> to vector<64x128xi1>
    %19 = vector.broadcast %cst_7 : f32 to vector<64x128xf32>
    %20 = arith.select %18, %10, %19 : vector<64x128xi1>, vector<64x128xf32>
    %c0_8 = arith.constant 0 : index
    %c0_9 = arith.constant 0 : index
    %21 = vector.load %arg4[%c0_8, %c0_9] : memref<64x128xf32, #tpu.memory_space<vmem>>, vector<64x128xf32>
    tpu.vector_store %arg4[%c0_8, %c0_9], %20 {strides = array<i32>} : memref<64x128xf32, #tpu.memory_space<vmem>>, vector<64x128xf32>,
    %cst_10 = arith.constant dense<0.000000e+00> : vector<128xf32>
    %22 = vector.multi_reduction <add>, %20, %cst_10 [0] : vector<64x128xf32> to vector<128xf32>
    %23 = vector.shape_cast %22 : vector<128xf32> to vector<1x128xf32>
    %24 = arith.mulf %20, %20 : vector<64x128xf32>
    %cst_11 = arith.constant dense<0.000000e+00> : vector<128xf32>
    %25 = vector.multi_reduction <add>, %24, %cst_11 [0] : vector<64x128xf32> to vector<128xf32>
    %26 = vector.shape_cast %25 : vector<128xf32> to vector<1x128xf32>
    %27 = tpu.concatenate %23, %26 in 0 : vector<1x128xf32>, vector<1x128xf32> -> vector<2x128xf32>
    %28 = vector.shape_cast %27 : vector<2x128xf32> to vector<1x2x128xf32>
    %c0_12 = arith.constant 0 : index
    %c0_13 = arith.constant 0 : index
    %c0_14 = arith.constant 0 : index
    %29 = vector.load %arg5[%c0_12, %c0_13, %c0_14] : memref<1x2x128xf32, #tpu.memory_space<vmem>>, vector<1x2x128xf32>
    tpu.vector_store %arg5[%c0_12, %c0_13, %c0_14], %28 {strides = array<i32>} : memref<1x2x128xf32, #tpu.memory_space<vmem>>, vector<1x2x128xf32>,
    return
  }
  func.func @transform_0(%arg0: i32) -> (i32, i32) {
    %c0_i32 = arith.constant 0 : i32
    %c0_i32_0 = arith.constant 0 : i32
    return %arg0, %c0_i32 : i32, i32
  }
  func.func @transform_1(%arg0: i32) -> (i32, i32) {
    %c0_i32 = arith.constant 0 : i32
    %c0_i32_0 = arith.constant 0 : i32
    %c0_i32_1 = arith.constant 0 : i32
    return %c0_i32, %c0_i32_0 : i32, i32
  }
  func.func @transform_2(%arg0: i32) -> (i32, i32) {
    %c0_i32 = arith.constant 0 : i32
    %c0_i32_0 = arith.constant 0 : i32
    %c0_i32_1 = arith.constant 0 : i32
    return %c0_i32, %c0_i32_0 : i32, i32
  }
  func.func @transform_3(%arg0: i32) -> (i32, i32) {
    %c0_i32 = arith.constant 0 : i32
    %c0_i32_0 = arith.constant 0 : i32
    return %arg0, %c0_i32 : i32, i32
  }
  func.func @transform_4(%arg0: i32) -> (i32, i32, i32) {
    %c0_i32 = arith.constant 0 : i32
    %c0_i32_0 = arith.constant 0 : i32
    %c0_i32_1 = arith.constant 0 : i32
    return %arg0, %c0_i32, %c0_i32_0 : i32, i32, i32
  }
}

</mosaic_0001>

<llo_original>
// kernel: tpu_custom_call.1
$region0: #{tpu_custom_call.1}
  #allocation0 [shape = 'u32[]', space=smem, size = 0x4, offset = 0x4, fixed_abs, tag = 'smem constant byte address 0x4 - core index']
  #allocation1 [shape = 'u32[144,128]{1,0:T(1,128)}', space=vmem, size = 0x12000, scoped, tag = 'internal scratch']
  %s0 = inlined_call_operand.vmem [shape: bf16[64,20], index: 0, kind: input, shape index: {}]
  %s1 = inlined_call_operand.vmem [shape: bf16[20,128], index: 1, kind: input, shape index: {}]
  %s2 = inlined_call_operand.vmem [shape: f32[1,128], index: 2, kind: input, shape index: {}]
  %s3 = inlined_call_operand.hbm [shape: f32[64,128], index: 3, kind: output, shape index: {0}]
  %s4 = inlined_call_operand.hbm [shape: f32[1,2,128], index: 4, kind: output, shape index: {1}]
  %5 = xla_tuple %s3, %s4
  %s6 = sld [smem:[#allocation0]]
  $region30: #{tpu_custom_call.1} parent=0
    _
  %s8 = ssub.s32 1, %s6
  %s9 = scalar_select 0, %s8, %s6
  $region1: #{tpu_custom_call.1} parent=0
    #allocation2 [shape = 'u8[32768]{0}', space=vmem, size = 0x8000, scoped, tag = 'output window, operand 0, single buffered']
    #allocation3 [shape = 's32[1]{0}', space=sflag, size = 0x4, scoped, tag = 'scoped memory for tpu_custom_call.1']
    #allocation4 [shape = 'u8[1024]{0}', space=vmem, size = 0x400, scoped, tag = 'output window, operand 1, single buffered']
    #allocation5 [shape = 's32[1]{0}', space=sflag, size = 0x4, scoped, tag = 'scoped memory for tpu_custom_call.1']
    %10 = vsyncpa [#allocation3], 0
    %11 = vsyncpa [#allocation5], 0
    // Predicated region
    $region2: #{tpu_custom_call.1} parent=1 // pred_check
      _
    $region3: #{tpu_custom_call.1} parent=1 // pred_check_branch
      %13 = sbr.rel (0) target = $region5
    $region4: #{tpu_custom_call.1} parent=1 // pred_region
      _
    $region5: #{tpu_custom_call.1} parent=1 // pred_fallthru
      _
    // Predicated region
    $region6: #{tpu_custom_call.1} parent=1 // pred_check
      _
    $region7: #{tpu_custom_call.1} parent=1 // pred_check_branch
      %15 = sbr.rel (0) target = $region9
    $region8: #{tpu_custom_call.1} parent=1 // pred_region
      _
    $region9: #{tpu_custom_call.1} parent=1 // pred_fallthru
      _
    // Predicated region
    $region10: #{tpu_custom_call.1} parent=1 // pred_check
      _
    $region11: #{tpu_custom_call.1} parent=1 // pred_check_branch
      %17 = sbr.rel (0) target = $region13
    $region12: #{tpu_custom_call.1} parent=1 // pred_region
      _
    $region13: #{tpu_custom_call.1} parent=1 // pred_fallthru
      _
    %v19 = vld [vmem:[%s0] sm:$0xf]
    %v20 = vld [vmem:[%s0 + $0x4] sm:$0xf]
    %v21 = vld [vmem:[%s0 + $0x8] sm:$0xf]
    %v22 = vld [vmem:[%s0 + $0xc] sm:$0xf]
    %v23 = vld [vmem:[%s0 + $0x10] sm:$0xf]
    %v24 = vld [vmem:[%s0 + $0x14] sm:$0xf]
    %v25 = vld [vmem:[%s0 + $0x18] sm:$0xf]
    %v26 = vld [vmem:[%s0 + $0x1c] sm:$0xf]
    %v27 = vld [vmem:[%s1] sm:$0xf]
    %v28 = vld [vmem:[%s1 + $0x4] sm:$0xf]
    %v29 = vld [vmem:[%s1 + $0x8] sm:$0x3]
    %v30 = vld [vmem:[%s2] sm:$0x1]
    %v32 = vlaneseq
    %v33 = vshrl.u32 %v32, 7
    %v34 = vsub.s32 0, %v33
    %v35 = vrot.slane %v30, %v34
    %v45 = vunpack.c.l.b16 %v19
    %v46 = vunpack.c.l.b16 %v20
    %v47 = vunpack.c.l.b16 %v21
    %v48 = vunpack.c.l.b16 %v22
    %v49 = vunpack.c.l.b16 %v23
    %v50 = vunpack.c.l.b16 %v24
    %v51 = vunpack.c.l.b16 %v25
    %v52 = vunpack.c.l.b16 %v26
    %v53 = vpack.c.b16 %v46, %v45
    %v54 = vpack.c.b16 %v48, %v47
    %v55 = vpack.c.b16 %v50, %v49
    %v56 = vpack.c.b16 %v52, %v51
    %v60 = vunpack.c.l.b16 %v27
    %v61 = vunpack.c.l.b16 %v28
    %v62 = vunpack.c.l.b16 %v29
    %v63 = vpack.c.b16 %v61, %v60
    %v64 = vpack.c.b16 %v62, %v62
    %vm66 = vcmask 162816
    %v68 = vsel %vm66, %v53, 0
    %v71 = vsel %vm66, %v54, 0
    %v74 = vsel %vm66, %v55, 0
    %v77 = vsel %vm66, %v56, 0
    %vm79 = vcmask 1041408
    %v81 = vsel %vm79, %v64, 0
    %83 = vmatprep.subr.bf16.mxu0 0
    %84 = vmatpush1.bf16.msra.mxu0 0
    %85 = vmatprep.subr.bf16.mxu0 0
    %86 = vmatpush1.bf16.msra.mxu0 0
    %87 = vmatprep.subr.bf16.mxu0 0
    %88 = vmatpush1.bf16.msra.mxu0 0
    %89 = vmatprep.subr.bf16.mxu0 0
    %90 = vmatpush1.bf16.msra.mxu0 0
    %91 = vmatprep.subr.bf16.mxu0 0
    %92 = vmatpush1.bf16.msra.mxu0 0
    %93 = vmatprep.subr.bf16.mxu0 0
    %94 = vmatpush1.bf16.msra.mxu0 0
    %95 = vmatprep.subr.bf16.mxu0 0
    %96 = vmatpush1.bf16.msra.mxu0 %v81
    %97 = vmatprep.subr.bf16.mxu0 0
    %98 = vmatpush1.bf16.msra.mxu0 %v63
    %99 = vmatprep.subr.bf16.mxu0 0
    %100 = vmatpush2.bf16.msra.mxu0 0
    %101 = vmatprep.subr.bf16.mxu0 0
    %102 = vmatpush2.bf16.msra.mxu0 0
    %103 = vmatprep.subr.bf16.mxu0 0
    %104 = vmatpush2.bf16.msra.mxu0 0
    %105 = vmatprep.subr.bf16.mxu0 0
    %106 = vmatpush2.bf16.msra.mxu0 0
    %107 = vmatprep.subr.bf16.mxu0 0
    %108 = vmatpush2.bf16.msra.mxu0 0
    %109 = vmatprep.subr.bf16.mxu0 0
    %110 = vmatpush2.bf16.msra.mxu0 0
    %111 = vmatprep.subr.bf16.mxu0 0
    %112 = vmatpush2.bf16.msra.mxu0 0
    %113 = vmatprep.subr.bf16.mxu0 0
    %114 = vmatpush2.bf16.msra.mxu0 0
    %115 = vmatprep.mubr.bf16.mxu0 0
    %116 = vmatmul.mubr.bf16.gmra.mxu0 %v68
    %v117 = vpop.f32.mrf.mxu0
    %v118 = vadd.f32 %v35, %v117
    %v119 = vpop.f32.mrf.mxu0
    %v120 = vpop.f32.mrf.mxu0
    %v121 = vadd.f32 %v35, %v120
    %v122 = vpop.f32.mrf.mxu0
    %123 = vmatprep.mubr.bf16.mxu0 0
    %124 = vmatmul.mubr.bf16.gmra.mxu0 %v71
    %v125 = vpop.f32.mrf.mxu0
    %v126 = vadd.f32 %v35, %v125
    %v127 = vpop.f32.mrf.mxu0
    %v128 = vpop.f32.mrf.mxu0
    %v129 = vadd.f32 %v35, %v128
    %v130 = vpop.f32.mrf.mxu0
    %131 = vmatprep.mubr.bf16.mxu0 0
    %132 = vmatmul.mubr.bf16.gmra.mxu0 %v74
    %v133 = vpop.f32.mrf.mxu0
    %v134 = vadd.f32 %v35, %v133
    %v135 = vpop.f32.mrf.mxu0
    %v136 = vpop.f32.mrf.mxu0
    %v137 = vadd.f32 %v35, %v136
    %v138 = vpop.f32.mrf.mxu0
    %139 = vmatprep.mubr.bf16.mxu0 0
    %140 = vmatmul.mubr.bf16.gmra.mxu0 %v77
    %v141 = vpop.f32.mrf.mxu0
    %v142 = vadd.f32 %v35, %v141
    %v143 = vpop.f32.mrf.mxu0
    %v144 = vpop.f32.mrf.mxu0
    %v145 = vadd.f32 %v35, %v144
    %v146 = vpop.f32.mrf.mxu0
    %147 = vdwg.mxu0
    %vm148 = vcmp.gt.f32.partialorder %v118, 0.0
    %vm149 = vcmp.gt.f32.partialorder %v121, 0.0
    %vm150 = vcmp.gt.f32.partialorder %v126, 0.0
    %vm151 = vcmp.gt.f32.partialorder %v129, 0.0
    %vm152 = vcmp.gt.f32.partialorder %v134, 0.0
    %vm153 = vcmp.gt.f32.partialorder %v137, 0.0
    %vm154 = vcmp.gt.f32.partialorder %v142, 0.0
    %vm155 = vcmp.gt.f32.partialorder %v145, 0.0
    %v156 = vmul.f32 %v118, 0.01
    %v157 = vmul.f32 %v121, 0.01
    %v158 = vmul.f32 %v126, 0.01
    %v159 = vmul.f32 %v129, 0.01
    %v160 = vmul.f32 %v134, 0.01
    %v161 = vmul.f32 %v137, 0.01
    %v162 = vmul.f32 %v142, 0.01
    %v163 = vmul.f32 %v145, 0.01
    %v164 = vsel %vm148, %v118, %v156
    %v165 = vsel %vm149, %v121, %v157
    %v166 = vsel %vm150, %v126, %v158
    %v167 = vsel %vm151, %v129, %v159
    %v168 = vsel %vm152, %v134, %v160
    %v169 = vsel %vm153, %v137, %v161
    %v170 = vsel %vm154, %v142, %v162
    %v171 = vsel %vm155, %v145, %v163
    %v172 = vlaneseq
    %v173 = vshrl.u32 %v172, 7
    %v174 = vadd.s32 %v173, 8
    %v175 = vadd.s32 %v173, 16
    %v176 = vadd.s32 %v173, 24
    %v177 = vadd.s32 %v173, 32
    %v178 = vadd.s32 %v173, 40
    %v179 = vadd.s32 %v173, 48
    %v180 = vadd.s32 %v173, 56
    %s181 = smul.u32 0, 64
    %v182 = vstv %s181
    %v183 = vadd.s32 %v173, %v182
    %v184 = vadd.s32 %v174, %v182
    %v185 = vadd.s32 %v175, %v182
    %v186 = vadd.s32 %v176, %v182
    %v187 = vadd.s32 %v177, %v182
    %v188 = vadd.s32 %v178, %v182
    %v189 = vadd.s32 %v179, %v182
    %v190 = vadd.s32 %v180, %v182
    %vm191 = vcmp.lt.s32.totalorder %v183, 60
    %vm192 = vcmp.lt.s32.totalorder %v184, 60
    %vm193 = vcmp.lt.s32.totalorder %v185, 60
    %vm194 = vcmp.lt.s32.totalorder %v186, 60
    %vm195 = vcmp.lt.s32.totalorder %v187, 60
    %vm196 = vcmp.lt.s32.totalorder %v188, 60
    %vm197 = vcmp.lt.s32.totalorder %v189, 60
    %vm198 = vcmp.lt.s32.totalorder %v190, 60
    %v199 = vsel %vm191, 1, 0
    %v200 = vsel %vm192, 1, 0
    %v201 = vsel %vm193, 1, 0
    %v202 = vsel %vm194, 1, 0
    %v203 = vsel %vm195, 1, 0
    %v204 = vsel %vm196, 1, 0
    %v205 = vsel %vm197, 1, 0
    %v206 = vsel %vm198, 1, 0
    %vm207 = vcmp.eq.s32.totalorder %v199, 1
    %vm208 = vcmp.eq.s32.totalorder %v200, 1
    %vm209 = vcmp.eq.s32.totalorder %v201, 1
    %vm210 = vcmp.eq.s32.totalorder %v202, 1
    %vm211 = vcmp.eq.s32.totalorder %v203, 1
    %vm212 = vcmp.eq.s32.totalorder %v204, 1
    %vm213 = vcmp.eq.s32.totalorder %v205, 1
    %vm214 = vcmp.eq.s32.totalorder %v206, 1
    %v215 = vsel %vm207, %v164, 0.0
    %v216 = vsel %vm208, %v165, 0.0
    %v217 = vsel %vm209, %v166, 0.0
    %v218 = vsel %vm210, %v167, 0.0
    %v219 = vsel %vm211, %v168, 0.0
    %v220 = vsel %vm212, %v169, 0.0
    %v221 = vsel %vm213, %v170, 0.0
    %v222 = vsel %vm214, %v171, 0.0
    %223 = vst [vmem:[#allocation2] sm:$0xff] %v215
    %224 = vst [vmem:[#allocation2 + $0x8] sm:$0xff] %v216
    %225 = vst [vmem:[#allocation2 + $0x10] sm:$0xff] %v217
    %226 = vst [vmem:[#allocation2 + $0x18] sm:$0xff] %v218
    %227 = vst [vmem:[#allocation2 + $0x20] sm:$0xff] %v219
    %228 = vst [vmem:[#allocation2 + $0x28] sm:$0xff] %v220
    %229 = vst [vmem:[#allocation2 + $0x30] sm:$0xff] %v221
    %230 = vst [vmem:[#allocation2 + $0x38] sm:$0xff] %v222
    %v231 = vadd.f32 %v215, %v216
    %v232 = vadd.f32 %v231, %v217
    %v233 = vadd.f32 %v232, %v218
    %v234 = vadd.f32 %v233, %v219
    %v235 = vadd.f32 %v234, %v220
    %v236 = vadd.f32 %v235, %v221
    %v237 = vadd.f32 %v236, %v222
    %v238 = vrot.slane %v237, 4
    %v239 = vadd.f32 %v237, %v238
    %v240 = vrot.slane %v239, 2
    %v241 = vadd.f32 %v239, %v240
    %v242 = vrot.slane %v241, 1
    %v243 = vadd.f32 %v241, %v242
    %v244 = vmul.f32 %v215, %v215
    %v245 = vmul.f32 %v216, %v216
    %v246 = vmul.f32 %v217, %v217
    %v247 = vmul.f32 %v218, %v218
    %v248 = vmul.f32 %v219, %v219
    %v249 = vmul.f32 %v220, %v220
    %v250 = vmul.f32 %v221, %v221
    %v251 = vmul.f32 %v222, %v222
    %v252 = vadd.f32 %v244, %v245
    %v253 = vadd.f32 %v252, %v246
    %v254 = vadd.f32 %v253, %v247
    %v255 = vadd.f32 %v254, %v248
    %v256 = vadd.f32 %v255, %v249
    %v257 = vadd.f32 %v256, %v250
    %v258 = vadd.f32 %v257, %v251
    %v259 = vrot.slane %v258, 4
    %v260 = vadd.f32 %v258, %v259
    %v261 = vrot.slane %v260, 2
    %v262 = vadd.f32 %v260, %v261
    %v263 = vrot.slane %v262, 1
    %v264 = vadd.f32 %v262, %v263
    %vm265 = vcmask 1040384
    %v266 = vsel %vm265, %v243, %v264
    %267 = vst [vmem:[#allocation4] sm:$0x3] %v266
    // Predicated region
    $region14: #{tpu_custom_call.1} parent=1 // pred_check
      _
    $region15: #{tpu_custom_call.1} parent=1 // pred_check_branch
      %269 = sbr.rel (0) target = $region17
    $region16: #{tpu_custom_call.1} parent=1 // pred_region
      %s271 = ssub.s32 1024, 1024
      %272 = vsyncadd [#allocation3], %s271
      %s273 = sshll.u32 [#allocation2], 4
      %s274 = int_to_ptr.vmem [resolvable:$true] %s273
      %279 = dma.vmem_to_hbm [thread:$0]  %s274, 1024, %s3, [#allocation3], 128, 128, 8
    $region17: #{tpu_custom_call.1} parent=1 // pred_fallthru
      _
    // Predicated region
    $region18: #{tpu_custom_call.1} parent=1 // pred_check
      _
    $region19: #{tpu_custom_call.1} parent=1 // pred_check_branch
      %281 = sbr.rel (0) target = $region21
    $region20: #{tpu_custom_call.1} parent=1 // pred_region
      %s283 = ssub.s32 32, 32
      %284 = vsyncadd [#allocation5], %s283
      %s286 = sshll.u32 [#allocation4], 4
      %s287 = int_to_ptr.vmem [resolvable:$true] %s286
      %289 = dma.vmem_to_hbm [thread:$0]  %s287, 32, %s4, [#allocation5]
    $region21: #{tpu_custom_call.1} parent=1 // pred_fallthru
      _
    // Predicated region
    $region22: #{tpu_custom_call.1} parent=1 // pred_check
      _
    $region23: #{tpu_custom_call.1} parent=1 // pred_check_branch
      %291 = sbr.rel (0) target = $region25
    $region24: #{tpu_custom_call.1} parent=1 // pred_region
      %292 = dma.done [#allocation3], 1024
    $region25: #{tpu_custom_call.1} parent=1 // pred_fallthru
      _
    // Predicated region
    $region26: #{tpu_custom_call.1} parent=1 // pred_check
      _
    $region27: #{tpu_custom_call.1} parent=1 // pred_check_branch
      %294 = sbr.rel (0) target = $region29
    $region28: #{tpu_custom_call.1} parent=1 // pred_region
      %295 = dma.done [#allocation5], 32
    $region29: #{tpu_custom_call.1} parent=1 // pred_fallthru
      _
    %296 = vsyncpa [#allocation3], 1
    %297 = vsyncpa [#allocation5], 1

</llo_original>
